<compile_context>
chip_gen: v5e
topology: v5e:2x2
jax: 0.10.0
libtpu: 0.0.40
codegen_flags: <defaults>
</compile_context>

<pallas_src>
import jax
import jax.numpy as jnp
from jax.experimental import pallas as pl
from jax.experimental.pallas import tpu as pltpu

H1 = 128          # fc1 output features
H2 = 64           # hidden2 output features (logical)
H2_PAD = 128      # hidden2 padded to full lane width (zero pad -> exact)
LANE = 128
NEG_INF = -1e30   # bias for padded output classes so softmax ignores them

VMEM_BUDGET = 40 * 1024 * 1024   # tile-sizing budget for double-buffered x/out
VMEM_LIMIT = 48 * 1024 * 1024    # scoped-VMEM limit (respects v7x 64 MiB VMEM)
MAX_TILE_B = 2048                # measured mem-bound scaling saturates ~512-2048


def _cdiv(a, b):
    return (a + b - 1) // b


def _round_up(x, m):
    return (x + m - 1) // m * m


def mlp_kernel(x_ref, w1_ref, b1_ref, w2_ref, b2_ref, w3_ref, b3_ref, o_ref):
    # In-kernel bf16 cast of the f32 x tile (VPU; avoids a wrapper-side HBM copy).
    x = x_ref[...].astype(jnp.bfloat16)

    # fc1 + ReLU  (bf16 MXU inputs, f32 accumulate / elementwise)
    h1 = jnp.dot(x, w1_ref[...], preferred_element_type=jnp.float32) + b1_ref[...]
    h1 = jnp.maximum(h1, 0.0)
    # dropout(p=0.2) -> identity (inference semantics)
    # TODO(synk): training-mode dropout would use pltpu.prng_seed/prng_random_bits.

    # hidden2 + ReLU  (hidden dim zero-padded 64 -> 128, exact)
    h2 = jnp.dot(h1.astype(jnp.bfloat16), w2_ref[...],
                 preferred_element_type=jnp.float32) + b2_ref[...]
    h2 = jnp.maximum(h2, 0.0)

    # output layer; padded class columns carry bias -1e30 -> exp() == 0
    logits = jnp.dot(h2.astype(jnp.bfloat16), w3_ref[...],
                     preferred_element_type=jnp.float32) + b3_ref[...]
    m = jnp.max(logits, axis=-1, keepdims=True)
    e = jnp.exp(logits - m)
    denom = jnp.sum(e, axis=-1, keepdims=True)
    o_ref[...] = (e * pl.reciprocal(denom, approx=True)).astype(o_ref.dtype)


def _choose_tiling(b, d_in):
    """Pick (tile_b, n_steps): biggest tile inside the VMEM budget, >=2 grid
    steps for v7x megacore when the batch allows, minimal batch-pad waste."""
    # Double-buffered f32 x tile + double-buffered bf16 output tile, per row.
    bytes_per_row = 2 * d_in * 4 + 2 * LANE * 2
    tile_max = (VMEM_BUDGET // bytes_per_row) // 8 * 8
    tile_max = max(8, min(MAX_TILE_B, tile_max))
    if b >= 16:
        # Keep grid length >= 2 so "parallel" can shard across 2 TCs (v7x).
        tile_max = min(tile_max, _round_up(_cdiv(b, 2), 8))
    n_steps = _cdiv(b, tile_max)
    tile_b = _round_up(_cdiv(b, n_steps), 8)   # re-fit tile -> minimal padding
    return tile_b, n_steps


def _pack_params(params, n_pad):
    """Pad & cast weights for lane-dense, bf16-MXU execution (exact math)."""
    w1, b1, w2, b2, w3, b3 = params
    out_dim = w3.shape[1]

    w1p = w1.astype(jnp.bfloat16)                       # no D padding needed
    b1p = b1.reshape(1, H1).astype(jnp.float32)

    w2p = jnp.zeros((H1, H2_PAD), jnp.float32).at[:, :H2].set(w2)
    w2p = w2p.astype(jnp.bfloat16)
    b2p = jnp.zeros((1, H2_PAD), jnp.float32).at[:, :H2].set(b2.reshape(1, H2))

    w3p = jnp.zeros((H2_PAD, n_pad), jnp.float32).at[:H2, :out_dim].set(w3)
    w3p = w3p.astype(jnp.bfloat16)
    b3p = jnp.full((1, n_pad), NEG_INF, jnp.float32)
    b3p = b3p.at[:, :out_dim].set(b3.reshape(1, out_dim))
    return w1p, b1p, w2p, b2p, w3p, b3p


def logistic_regression_forward(x_nchw, params):
    """x_nchw: [B, C, H, W] float32. Returns softmax probs [B, output_dim] (bf16)."""
    b = x_nchw.shape[0]
    x_flat = x_nchw.reshape(b, -1)              # torch: x.view(x.size(0), -1)
    d_in = x_flat.shape[1]
    out_dim = params[4].shape[1]                # w3: [64, out_dim]
    n_pad = _round_up(out_dim, LANE)

    tile_b, n_steps = _choose_tiling(b, d_in)
    b_pad = tile_b * n_steps
    if b_pad != b:
        # Only the small batch tail is padded (no dtype cast, no D padding);
        # aligned batches pass x straight through with zero extra copies.
        x_flat = jnp.pad(x_flat, ((0, b_pad - b), (0, 0)))

    w1p, b1p, w2p, b2p, w3p, b3p = _pack_params(params, n_pad)

    weight_bytes = (w1p.size + w2p.size + w3p.size) * 2 \
        + (b1p.size + b2p.size + b3p.size) * 4
    cost = pl.CostEstimate(
        flops=2 * b_pad * (d_in * H1 + H1 * H2_PAD + H2_PAD * n_pad),
        transcendentals=b_pad * n_pad,
        bytes_accessed=b_pad * d_in * 4 + weight_bytes + b_pad * n_pad * 2,
    )

    probs_pad = pl.pallas_call(
        mlp_kernel,
        out_shape=jax.ShapeDtypeStruct((b_pad, n_pad), jnp.bfloat16),
        grid_spec=pltpu.PrefetchScalarGridSpec(
            num_scalar_prefetch=0,
            grid=(n_steps,),
            in_specs=[
                pl.BlockSpec((tile_b, d_in), lambda i: (i, 0)),    # x tile (f32)
                pl.BlockSpec((d_in, H1), lambda i: (0, 0)),        # w1 resident
                pl.BlockSpec((1, H1), lambda i: (0, 0)),           # b1
                pl.BlockSpec((H1, H2_PAD), lambda i: (0, 0)),      # w2
                pl.BlockSpec((1, H2_PAD), lambda i: (0, 0)),       # b2
                pl.BlockSpec((H2_PAD, n_pad), lambda i: (0, 0)),   # w3
                pl.BlockSpec((1, n_pad), lambda i: (0, 0)),        # b3
            ],
            out_specs=pl.BlockSpec((tile_b, n_pad), lambda i: (i, 0)),
        ),
        compiler_params=pltpu.CompilerParams(
            dimension_semantics=("parallel",),
            vmem_limit_bytes=VMEM_LIMIT,
        ),
        cost_estimate=cost,
    )(x_flat, w1p, b1p, w2p, b2p, w3p, b3p)

    return probs_pad[:b, :out_dim]


def init_params(key, input_dim, output_dim):
    """Deterministic init mimicking nn.Linear's uniform(-1/sqrt(in), 1/sqrt(in))."""
    def linear(key, fan_in, fan_out):
        kw, kb = jax.random.split(key)
        bound = 1.0 / jnp.sqrt(jnp.float32(fan_in))
        w = jax.random.uniform(kw, (fan_in, fan_out), jnp.float32, -bound, bound)
        b = jax.random.uniform(kb, (1, fan_out), jnp.float32, -bound, bound)
        return w, b

    k1, k2, k3 = jax.random.split(key, 3)
    w1, b1 = linear(k1, input_dim, 128)
    w2, b2 = linear(k2, 128, 64)
    w3, b3 = linear(k3, 64, output_dim)
    return (w1, b1, w2, b2, w3, b3)


def reference_forward(x_nchw, params):
    """Pure-JAX f32 reference matching the PyTorch module (inference)."""
    w1, b1, w2, b2, w3, b3 = params
    x = x_nchw.reshape(x_nchw.shape[0], -1)
    h1 = jnp.maximum(x @ w1 + b1, 0.0)
    h2 = jnp.maximum(h1 @ w2 + b2, 0.0)
    logits = h2 @ w3 + b3
    return jax.nn.softmax(logits, axis=1)


if __name__ == "__main__":
    key = jax.random.PRNGKey(0)
    kx, kp = jax.random.split(key)

    # Small NCHW input consistent with x.view(x.size(0), -1):
    B, C, H, W = 2, 4, 16, 16
    input_dim = C * H * W          # 1024
    output_dim = 10

    x = jax.random.normal(kx, (B, C, H, W), dtype=jnp.float32)
    params = init_params(kp, input_dim, output_dim)

    out = logistic_regression_forward(x, params)
    out = jax.block_until_ready(out)

    assert out.shape == (B, output_dim)
    out_f32 = out.astype(jnp.float32)
    # softmax rows sum to ~1 (approx reciprocal + bf16 matmul/output tolerance)
    assert jnp.allclose(jnp.sum(out_f32, axis=1), 1.0, atol=1e-2)
    # matches f32 reference within bf16-matmul / bf16-output tolerance
    ref = reference_forward(x, params)
    assert jnp.allclose(out_f32, ref, atol=3e-2)
    print("KERNEL_OK")
</pallas_src>

<mosaic_0001>
module attributes {stable_mosaic.version = 11 : i64} {
  func.func @mlp_kernel(%arg0: i32, %arg1: memref<8x1024xf32, #tpu.memory_space<vmem>>, %arg2: memref<1024x128xbf16, #tpu.memory_space<vmem>>, %arg3: memref<1x128xf32, #tpu.memory_space<vmem>>, %arg4: memref<128x128xbf16, #tpu.memory_space<vmem>>, %arg5: memref<1x128xf32, #tpu.memory_space<vmem>>, %arg6: memref<128x128xbf16, #tpu.memory_space<vmem>>, %arg7: memref<1x128xf32, #tpu.memory_space<vmem>>, %arg8: memref<8x128xbf16, #tpu.memory_space<vmem>>) attributes {dimension_semantics = [#tpu.dimension_semantics<parallel>], iteration_bounds = array<i64: 1>, scalar_prefetch = 0 : i64, scratch_operands = 0 : i64, tpu.core_type = #tpu.core_type<tc>, window_params = [{transform_indices = @transform_0, window_bounds = array<i64: 8, 1024>}, {pipeline_mode = #tpu.pipeline_mode<synchronous>, transform_indices = @transform_1, window_bounds = array<i64: 1024, 128>}, {pipeline_mode = #tpu.pipeline_mode<synchronous>, transform_indices = @transform_2, window_bounds = array<i64: 1, 128>}, {pipeline_mode = #tpu.pipeline_mode<synchronous>, transform_indices = @transform_3, window_bounds = array<i64: 128, 128>}, {pipeline_mode = #tpu.pipeline_mode<synchronous>, transform_indices = @transform_4, window_bounds = array<i64: 1, 128>}, {pipeline_mode = #tpu.pipeline_mode<synchronous>, transform_indices = @transform_5, window_bounds = array<i64: 128, 128>}, {pipeline_mode = #tpu.pipeline_mode<synchronous>, transform_indices = @transform_6, window_bounds = array<i64: 1, 128>}, {transform_indices = @transform_7, window_bounds = array<i64: 8, 128>}]} {
    %c0 = arith.constant 0 : index
    %c0_0 = arith.constant 0 : index
    %0 = vector.load %arg1[%c0, %c0_0] : memref<8x1024xf32, #tpu.memory_space<vmem>>, vector<8x1024xf32>
    %1 = arith.truncf %0 : vector<8x1024xf32> to vector<8x1024xbf16>
    %c0_1 = arith.constant 0 : index
    %c0_2 = arith.constant 0 : index
    %2 = vector.load %arg2[%c0_1, %c0_2] : memref<1024x128xbf16, #tpu.memory_space<vmem>>, vector<1024x128xbf16>
    %cst = arith.constant dense<0.000000e+00> : vector<8x128xf32>
    %3 = tpu.matmul %1, %2, %cst {dimension_numbers = #tpu.dot_dimension_numbers<[1], [0], [0], [1], [0, 0, 1, 1], [], []>} : vector<8x1024xbf16>, vector<1024x128xbf16>, vector<8x128xf32> -> vector<8x128xf32>
    %c0_3 = arith.constant 0 : index
    %c0_4 = arith.constant 0 : index
    %4 = vector.load %arg3[%c0_3, %c0_4] : memref<1x128xf32, #tpu.memory_space<vmem>>, vector<1x128xf32>
    %5 = vector.broadcast %4 : vector<1x128xf32> to vector<8x128xf32>
    %6 = arith.addf %3, %5 : vector<8x128xf32>
    %cst_5 = arith.constant 0.000000e+00 : f32
    %7 = vector.broadcast %cst_5 : f32 to vector<8x128xf32>
    %8 = arith.maximumf %6, %7 : vector<8x128xf32>
    %9 = arith.truncf %8 : vector<8x128xf32> to vector<8x128xbf16>
    %c0_6 = arith.constant 0 : index
    %c0_7 = arith.constant 0 : index
    %10 = vector.load %arg4[%c0_6, %c0_7] : memref<128x128xbf16, #tpu.memory_space<vmem>>, vector<128x128xbf16>
    %cst_8 = arith.constant dense<0.000000e+00> : vector<8x128xf32>
    %11 = tpu.matmul %9, %10, %cst_8 {dimension_numbers = #tpu.dot_dimension_numbers<[1], [0], [0], [1], [0, 0, 1, 1], [], []>} : vector<8x128xbf16>, vector<128x128xbf16>, vector<8x128xf32> -> vector<8x128xf32>
    %c0_9 = arith.constant 0 : index
    %c0_10 = arith.constant 0 : index
    %12 = vector.load %arg5[%c0_9, %c0_10] : memref<1x128xf32, #tpu.memory_space<vmem>>, vector<1x128xf32>
    %13 = vector.broadcast %12 : vector<1x128xf32> to vector<8x128xf32>
    %14 = arith.addf %11, %13 : vector<8x128xf32>
    %cst_11 = arith.constant 0.000000e+00 : f32
    %15 = vector.broadcast %cst_11 : f32 to vector<8x128xf32>
    %16 = arith.maximumf %14, %15 : vector<8x128xf32>
    %17 = arith.truncf %16 : vector<8x128xf32> to vector<8x128xbf16>
    %c0_12 = arith.constant 0 : index
    %c0_13 = arith.constant 0 : index
    %18 = vector.load %arg6[%c0_12, %c0_13] : memref<128x128xbf16, #tpu.memory_space<vmem>>, vector<128x128xbf16>
    %cst_14 = arith.constant dense<0.000000e+00> : vector<8x128xf32>
    %19 = tpu.matmul %17, %18, %cst_14 {dimension_numbers = #tpu.dot_dimension_numbers<[1], [0], [0], [1], [0, 0, 1, 1], [], []>} : vector<8x128xbf16>, vector<128x128xbf16>, vector<8x128xf32> -> vector<8x128xf32>
    %c0_15 = arith.constant 0 : index
    %c0_16 = arith.constant 0 : index
    %20 = vector.load %arg7[%c0_15, %c0_16] : memref<1x128xf32, #tpu.memory_space<vmem>>, vector<1x128xf32>
    %21 = vector.broadcast %20 : vector<1x128xf32> to vector<8x128xf32>
    %22 = arith.addf %19, %21 : vector<8x128xf32>
    %cst_17 = arith.constant dense<0xFF800000> : vector<8xf32>
    %23 = vector.multi_reduction <maximumf>, %22, %cst_17 [1] : vector<8x128xf32> to vector<8xf32>
    %24 = vector.shape_cast %23 : vector<8xf32> to vector<8x1xf32>
    %25 = vector.broadcast %24 : vector<8x1xf32> to vector<8x128xf32>
    %26 = arith.subf %22, %25 : vector<8x128xf32>
    %27 = math.exp %26 : vector<8x128xf32>
    %cst_18 = arith.constant dense<0.000000e+00> : vector<8xf32>
    %28 = vector.multi_reduction <add>, %27, %cst_18 [1] : vector<8x128xf32> to vector<8xf32>
    %29 = vector.shape_cast %28 : vector<8xf32> to vector<8x1xf32>
    %30 = tpu.reciprocal %29 {approx = true} : vector<8x1xf32> -> vector<8x1xf32>
    %31 = vector.broadcast %30 : vector<8x1xf32> to vector<8x128xf32>
    %32 = arith.mulf %27, %31 : vector<8x128xf32>
    %33 = arith.truncf %32 : vector<8x128xf32> to vector<8x128xbf16>
    %c0_19 = arith.constant 0 : index
    %c0_20 = arith.constant 0 : index
    %34 = vector.load %arg8[%c0_19, %c0_20] : memref<8x128xbf16, #tpu.memory_space<vmem>>, vector<8x128xbf16>
    tpu.vector_store %arg8[%c0_19, %c0_20], %33 {strides = array<i32>} : memref<8x128xbf16, #tpu.memory_space<vmem>>, vector<8x128xbf16>,
    return
  }
  func.func @transform_0(%arg0: i32) -> (i32, i32) {
    %c0_i32 = arith.constant 0 : i32
    %c0_i32_0 = arith.constant 0 : i32
    return %arg0, %c0_i32 : i32, i32
  }
  func.func @transform_1(%arg0: i32) -> (i32, i32) {
    %c0_i32 = arith.constant 0 : i32
    %c0_i32_0 = arith.constant 0 : i32
    %c0_i32_1 = arith.constant 0 : i32
    return %c0_i32, %c0_i32_0 : i32, i32
  }
  func.func @transform_2(%arg0: i32) -> (i32, i32) {
    %c0_i32 = arith.constant 0 : i32
    %c0_i32_0 = arith.constant 0 : i32
    %c0_i32_1 = arith.constant 0 : i32
    return %c0_i32, %c0_i32_0 : i32, i32
  }
  func.func @transform_3(%arg0: i32) -> (i32, i32) {
    %c0_i32 = arith.constant 0 : i32
    %c0_i32_0 = arith.constant 0 : i32
    %c0_i32_1 = arith.constant 0 : i32
    return %c0_i32, %c0_i32_0 : i32, i32
  }
  func.func @transform_4(%arg0: i32) -> (i32, i32) {
    %c0_i32 = arith.constant 0 : i32
    %c0_i32_0 = arith.constant 0 : i32
    %c0_i32_1 = arith.constant 0 : i32
    return %c0_i32, %c0_i32_0 : i32, i32
  }
  func.func @transform_5(%arg0: i32) -> (i32, i32) {
    %c0_i32 = arith.constant 0 : i32
    %c0_i32_0 = arith.constant 0 : i32
    %c0_i32_1 = arith.constant 0 : i32
    return %c0_i32, %c0_i32_0 : i32, i32
  }
  func.func @transform_6(%arg0: i32) -> (i32, i32) {
    %c0_i32 = arith.constant 0 : i32
    %c0_i32_0 = arith.constant 0 : i32
    %c0_i32_1 = arith.constant 0 : i32
    return %c0_i32, %c0_i32_0 : i32, i32
  }
  func.func @transform_7(%arg0: i32) -> (i32, i32) {
    %c0_i32 = arith.constant 0 : i32
    %c0_i32_0 = arith.constant 0 : i32
    return %arg0, %c0_i32 : i32, i32
  }
}

</mosaic_0001>

<llo_original>
// kernel: tpu_custom_call.1
$region0: #{tpu_custom_call.1}
  #allocation0 [shape = 'u32[]', space=smem, size = 0x4, offset = 0x4, fixed_abs, tag = 'smem constant byte address 0x4 - core index']
  #allocation1 [shape = 'u32[72,128]{1,0:T(1,128)}', space=vmem, size = 0x9000, scoped, tag = 'internal scratch']
  %s0 = inlined_call_operand.hbm [shape: f32[8,1024], index: 0, kind: input, shape index: {}]
  %s1 = inlined_call_operand.hbm [shape: bf16[1024,128], index: 1, kind: input, shape index: {}]
  %s2 = inlined_call_operand.vmem [shape: f32[1,128], index: 2, kind: input, shape index: {}]
  %s3 = inlined_call_operand.hbm [shape: bf16[128,128], index: 3, kind: input, shape index: {}]
  %s4 = inlined_call_operand.vmem [shape: f32[1,128], index: 4, kind: input, shape index: {}]
  %s5 = inlined_call_operand.hbm [shape: bf16[128,128], index: 5, kind: input, shape index: {}]
  %s6 = inlined_call_operand.vmem [shape: f32[1,128], index: 6, kind: input, shape index: {}]
  %s7 = inlined_call_operand.hbm [shape: bf16[8,128], index: 7, kind: output, shape index: {}]
  %s8 = sld [smem:[#allocation0]]
  $region54: #{tpu_custom_call.1} parent=0
    _
  %s10 = ssub.s32 1, %s8
  %s11 = scalar_select 0, %s10, %s8
  $region1: #{tpu_custom_call.1} parent=0
    #allocation2 [shape = 'u8[32768]{0}', space=vmem, size = 0x8000, scoped, tag = 'input window, operand 0, single buffered']
    #allocation3 [shape = 's32[1]{0}', space=sflag, size = 0x4, scoped, tag = 'scoped memory for tpu_custom_call.1']
    #allocation4 [shape = 's32[1]{0}', space=sflag, size = 0x4, scoped, tag = 'scoped memory for tpu_custom_call.1']
    #allocation5 [shape = 'u8[262144]{0}', space=vmem, size = 0x40000, scoped, tag = 'input window, operand 1, single buffered']
    #allocation6 [shape = 's32[1]{0}', space=sflag, size = 0x4, scoped, tag = 'scoped memory for tpu_custom_call.1']
    #allocation7 [shape = 'u8[32768]{0}', space=vmem, size = 0x8000, scoped, tag = 'input window, operand 3, single buffered']
    #allocation8 [shape = 'u8[32768]{0}', space=vmem, size = 0x8000, scoped, tag = 'input window, operand 5, single buffered']
    #allocation9 [shape = 's32[1]{0}', space=sflag, size = 0x4, scoped, tag = 'scoped memory for tpu_custom_call.1']
    #allocation10 [shape = 'u8[2048]{0}', space=vmem, size = 0x800, scoped, tag = 'output window, operand 0, single buffered']
    %12 = vsyncpa [#allocation3], 0
    %13 = vsyncpa [#allocation6], 0
    %14 = vsyncpa [#allocation9], 0
    %15 = vsyncpa [#allocation4], 0
    // Predicated region
    $region2: #{tpu_custom_call.1} parent=1 // pred_check
      _
    $region3: #{tpu_custom_call.1} parent=1 // pred_check_branch
      %17 = sbr.rel (0) target = $region5
    $region4: #{tpu_custom_call.1} parent=1 // pred_region
      %19 = vsyncadd [#allocation3], 0
      %s21 = sshll.u32 %s0, 4
      %s22 = int_to_ptr.hbm [resolvable:$true] %s21
      %s23 = sshll.u32 [#allocation2], 4
      %s24 = int_to_ptr.vmem [resolvable:$true] %s23
      %26 = dma.hbm_to_vmem [thread:$0]  %s22, 1024, %s24, [#allocation3]
    $region5: #{tpu_custom_call.1} parent=1 // pred_fallthru
      _
    // Predicated region
    $region6: #{tpu_custom_call.1} parent=1 // pred_check
      _
    $region7: #{tpu_custom_call.1} parent=1 // pred_check_branch
      %28 = sbr.rel (0) target = $region9
    $region8: #{tpu_custom_call.1} parent=1 // pred_region
      %30 = vsyncadd [#allocation6], 0
      %s31 = sshll.u32 %s1, 4
      %s32 = int_to_ptr.hbm [resolvable:$true] %s31
      %s33 = sshll.u32 [#allocation5], 4
      %s34 = int_to_ptr.vmem [resolvable:$true] %s33
      %39 = dma.hbm_to_vmem [thread:$0]  %s32, 8192, %s34, [#allocation6], 64, 64, 4
    $region9: #{tpu_custom_call.1} parent=1 // pred_fallthru
      _
    // Predicated region
    $region10: #{tpu_custom_call.1} parent=1 // pred_check
      _
    $region11: #{tpu_custom_call.1} parent=1 // pred_check_branch
      %41 = sbr.rel (0) target = $region13
    $region12: #{tpu_custom_call.1} parent=1 // pred_region
      _
    $region13: #{tpu_custom_call.1} parent=1 // pred_fallthru
      _
    // Predicated region
    $region14: #{tpu_custom_call.1} parent=1 // pred_check
      _
    $region15: #{tpu_custom_call.1} parent=1 // pred_check_branch
      %43 = sbr.rel (0) target = $region17
    $region16: #{tpu_custom_call.1} parent=1 // pred_region
      %45 = vsyncadd [#allocation6], 0
      %s46 = sshll.u32 %s3, 4
      %s47 = int_to_ptr.hbm [resolvable:$true] %s46
      %s48 = sshll.u32 [#allocation7], 4
      %s49 = int_to_ptr.vmem [resolvable:$true] %s48
      %54 = dma.hbm_to_vmem [thread:$0]  %s47, 1024, %s49, [#allocation6], 64, 64, 4
    $region17: #{tpu_custom_call.1} parent=1 // pred_fallthru
      _
    // Predicated region
    $region18: #{tpu_custom_call.1} parent=1 // pred_check
      _
    $region19: #{tpu_custom_call.1} parent=1 // pred_check_branch
      %56 = sbr.rel (0) target = $region21
    $region20: #{tpu_custom_call.1} parent=1 // pred_region
      _
    $region21: #{tpu_custom_call.1} parent=1 // pred_fallthru
      _
    // Predicated region
    $region22: #{tpu_custom_call.1} parent=1 // pred_check
      _
    $region23: #{tpu_custom_call.1} parent=1 // pred_check_branch
      %58 = sbr.rel (0) target = $region25
    $region24: #{tpu_custom_call.1} parent=1 // pred_region
      %60 = vsyncadd [#allocation9], 0
      %s61 = sshll.u32 %s5, 4
      %s62 = int_to_ptr.hbm [resolvable:$true] %s61
      %s63 = sshll.u32 [#allocation8], 4
      %s64 = int_to_ptr.vmem [resolvable:$true] %s63
      %69 = dma.hbm_to_vmem [thread:$0]  %s62, 1024, %s64, [#allocation9], 64, 64, 4
    $region25: #{tpu_custom_call.1} parent=1 // pred_fallthru
      _
    // Predicated region
    $region26: #{tpu_custom_call.1} parent=1 // pred_check
      _
    $region27: #{tpu_custom_call.1} parent=1 // pred_check_branch
      %71 = sbr.rel (0) target = $region29
    $region28: #{tpu_custom_call.1} parent=1 // pred_region
      _
    $region29: #{tpu_custom_call.1} parent=1 // pred_fallthru
      _
    // Predicated region
    $region30: #{tpu_custom_call.1} parent=1 // pred_check
      _
    $region31: #{tpu_custom_call.1} parent=1 // pred_check_branch
      %73 = sbr.rel (0) target = $region33
    $region32: #{tpu_custom_call.1} parent=1 // pred_region
      %75 = dma.done [#allocation3], 1024
    $region33: #{tpu_custom_call.1} parent=1 // pred_fallthru
      _
    // Predicated region
    $region34: #{tpu_custom_call.1} parent=1 // pred_check
      _
    $region35: #{tpu_custom_call.1} parent=1 // pred_check_branch
      %77 = sbr.rel (0) target = $region37
    $region36: #{tpu_custom_call.1} parent=1 // pred_region
      %79 = dma.done [#allocation6], 8192
    $region37: #{tpu_custom_call.1} parent=1 // pred_fallthru
      _
    // Predicated region
    $region38: #{tpu_custom_call.1} parent=1 // pred_check
      _
    $region39: #{tpu_custom_call.1} parent=1 // pred_check_branch
      %81 = sbr.rel (0) target = $region41
    $region40: #{tpu_custom_call.1} parent=1 // pred_region
      %83 = dma.done [#allocation6], 1024
    $region41: #{tpu_custom_call.1} parent=1 // pred_fallthru
      _
    // Predicated region
    $region42: #{tpu_custom_call.1} parent=1 // pred_check
      _
    $region43: #{tpu_custom_call.1} parent=1 // pred_check_branch
      %85 = sbr.rel (0) target = $region45
    $region44: #{tpu_custom_call.1} parent=1 // pred_region
      %87 = dma.done [#allocation9], 1024
    $region45: #{tpu_custom_call.1} parent=1 // pred_fallthru
      _
    %v88 = vld [vmem:[#allocation2] sm:$0xff]
    %v89 = vld [vmem:[#allocation2 + $0x8] sm:$0xff]
    %v90 = vld [vmem:[#allocation2 + $0x10] sm:$0xff]
    %v91 = vld [vmem:[#allocation2 + $0x18] sm:$0xff]
    %v92 = vld [vmem:[#allocation2 + $0x20] sm:$0xff]
    %v93 = vld [vmem:[#allocation2 + $0x28] sm:$0xff]
    %v94 = vld [vmem:[#allocation2 + $0x30] sm:$0xff]
    %v95 = vld [vmem:[#allocation2 + $0x38] sm:$0xff]
    %v96 = vpack.c.bf16 %v88, %v88
    %v97 = vpack.c.bf16 %v89, %v89
    %v98 = vpack.c.bf16 %v90, %v90
    %v99 = vpack.c.bf16 %v91, %v91
    %v100 = vpack.c.bf16 %v92, %v92
    %v101 = vpack.c.bf16 %v93, %v93
    %v102 = vpack.c.bf16 %v94, %v94
    %v103 = vpack.c.bf16 %v95, %v95
    %v104 = vld [vmem:[#allocation5] sm:$0xf]
    %v105 = vld [vmem:[#allocation5 + $0x4] sm:$0xf]
    %v106 = vld [vmem:[#allocation5 + $0x8] sm:$0xf]
    %v107 = vld [vmem:[#allocation5 + $0xc] sm:$0xf]
    %v108 = vld [vmem:[#allocation5 + $0x10] sm:$0xf]
    %v109 = vld [vmem:[#allocation5 + $0x14] sm:$0xf]
    %v110 = vld [vmem:[#allocation5 + $0x18] sm:$0xf]
    %v111 = vld [vmem:[#allocation5 + $0x1c] sm:$0xf]
    %v112 = vld [vmem:[#allocation5 + $0x20] sm:$0xf]
    %v113 = vld [vmem:[#allocation5 + $0x24] sm:$0xf]
    %v114 = vld [vmem:[#allocation5 + $0x28] sm:$0xf]
    %v115 = vld [vmem:[#allocation5 + $0x2c] sm:$0xf]
    %v116 = vld [vmem:[#allocation5 + $0x30] sm:$0xf]
    %v117 = vld [vmem:[#allocation5 + $0x34] sm:$0xf]
    %v118 = vld [vmem:[#allocation5 + $0x38] sm:$0xf]
    %v119 = vld [vmem:[#allocation5 + $0x3c] sm:$0xf]
    %v120 = vld [vmem:[#allocation5 + $0x40] sm:$0xf]
    %v121 = vld [vmem:[#allocation5 + $0x44] sm:$0xf]
    %v122 = vld [vmem:[#allocation5 + $0x48] sm:$0xf]
    %v123 = vld [vmem:[#allocation5 + $0x4c] sm:$0xf]
    %v124 = vld [vmem:[#allocation5 + $0x50] sm:$0xf]
    %v125 = vld [vmem:[#allocation5 + $0x54] sm:$0xf]
    %v126 = vld [vmem:[#allocation5 + $0x58] sm:$0xf]
    %v127 = vld [vmem:[#allocation5 + $0x5c] sm:$0xf]
    %v128 = vld [vmem:[#allocation5 + $0x60] sm:$0xf]
    %v129 = vld [vmem:[#allocation5 + $0x64] sm:$0xf]
    %v130 = vld [vmem:[#allocation5 + $0x68] sm:$0xf]
    %v131 = vld [vmem:[#allocation5 + $0x6c] sm:$0xf]
    %v132 = vld [vmem:[#allocation5 + $0x70] sm:$0xf]
    %v133 = vld [vmem:[#allocation5 + $0x74] sm:$0xf]
    %v134 = vld [vmem:[#allocation5 + $0x78] sm:$0xf]
    %v135 = vld [vmem:[#allocation5 + $0x7c] sm:$0xf]
    %v136 = vld [vmem:[#allocation5 + $0x80] sm:$0xf]
    %v137 = vld [vmem:[#allocation5 + $0x84] sm:$0xf]
    %v138 = vld [vmem:[#allocation5 + $0x88] sm:$0xf]
    %v139 = vld [vmem:[#allocation5 + $0x8c] sm:$0xf]
    %v140 = vld [vmem:[#allocation5 + $0x90] sm:$0xf]
    %v141 = vld [vmem:[#allocation5 + $0x94] sm:$0xf]
    %v142 = vld [vmem:[#allocation5 + $0x98] sm:$0xf]
    %v143 = vld [vmem:[#allocation5 + $0x9c] sm:$0xf]
    %v144 = vld [vmem:[#allocation5 + $0xa0] sm:$0xf]
    %v145 = vld [vmem:[#allocation5 + $0xa4] sm:$0xf]
    %v146 = vld [vmem:[#allocation5 + $0xa8] sm:$0xf]
    %v147 = vld [vmem:[#allocation5 + $0xac] sm:$0xf]
    %v148 = vld [vmem:[#allocation5 + $0xb0] sm:$0xf]
    %v149 = vld [vmem:[#allocation5 + $0xb4] sm:$0xf]
    %v150 = vld [vmem:[#allocation5 + $0xb8] sm:$0xf]
    %v151 = vld [vmem:[#allocation5 + $0xbc] sm:$0xf]
    %v152 = vld [vmem:[#allocation5 + $0xc0] sm:$0xf]
    %v153 = vld [vmem:[#allocation5 + $0xc4] sm:$0xf]
    %v154 = vld [vmem:[#allocation5 + $0xc8] sm:$0xf]
    %v155 = vld [vmem:[#allocation5 + $0xcc] sm:$0xf]
    %v156 = vld [vmem:[#allocation5 + $0xd0] sm:$0xf]
    %v157 = vld [vmem:[#allocation5 + $0xd4] sm:$0xf]
    %v158 = vld [vmem:[#allocation5 + $0xd8] sm:$0xf]
    %v159 = vld [vmem:[#allocation5 + $0xdc] sm:$0xf]
    %v160 = vld [vmem:[#allocation5 + $0xe0] sm:$0xf]
    %v161 = vld [vmem:[#allocation5 + $0xe4] sm:$0xf]
    %v162 = vld [vmem:[#allocation5 + $0xe8] sm:$0xf]
    %v163 = vld [vmem:[#allocation5 + $0xec] sm:$0xf]
    %v164 = vld [vmem:[#allocation5 + $0xf0] sm:$0xf]
    %v165 = vld [vmem:[#allocation5 + $0xf4] sm:$0xf]
    %v166 = vld [vmem:[#allocation5 + $0xf8] sm:$0xf]
    %v167 = vld [vmem:[#allocation5 + $0xfc] sm:$0xf]
    %v168 = vld [vmem:[#allocation5 + $0x100] sm:$0xf]
    %v169 = vld [vmem:[#allocation5 + $0x104] sm:$0xf]
    %v170 = vld [vmem:[#allocation5 + $0x108] sm:$0xf]
    %v171 = vld [vmem:[#allocation5 + $0x10c] sm:$0xf]
    %v172 = vld [vmem:[#allocation5 + $0x110] sm:$0xf]
    %v173 = vld [vmem:[#allocation5 + $0x114] sm:$0xf]
    %v174 = vld [vmem:[#allocation5 + $0x118] sm:$0xf]
    %v175 = vld [vmem:[#allocation5 + $0x11c] sm:$0xf]
    %v176 = vld [vmem:[#allocation5 + $0x120] sm:$0xf]
    %v177 = vld [vmem:[#allocation5 + $0x124] sm:$0xf]
    %v178 = vld [vmem:[#allocation5 + $0x128] sm:$0xf]
    %v179 = vld [vmem:[#allocation5 + $0x12c] sm:$0xf]
    %v180 = vld [vmem:[#allocation5 + $0x130] sm:$0xf]
    %v181 = vld [vmem:[#allocation5 + $0x134] sm:$0xf]
    %v182 = vld [vmem:[#allocation5 + $0x138] sm:$0xf]
    %v183 = vld [vmem:[#allocation5 + $0x13c] sm:$0xf]
    %v184 = vld [vmem:[#allocation5 + $0x140] sm:$0xf]
    %v185 = vld [vmem:[#allocation5 + $0x144] sm:$0xf]
    %v186 = vld [vmem:[#allocation5 + $0x148] sm:$0xf]
    %v187 = vld [vmem:[#allocation5 + $0x14c] sm:$0xf]
    %v188 = vld [vmem:[#allocation5 + $0x150] sm:$0xf]
    %v189 = vld [vmem:[#allocation5 + $0x154] sm:$0xf]
    %v190 = vld [vmem:[#allocation5 + $0x158] sm:$0xf]
    %v191 = vld [vmem:[#allocation5 + $0x15c] sm:$0xf]
    %v192 = vld [vmem:[#allocation5 + $0x160] sm:$0xf]
    %v193 = vld [vmem:[#allocation5 + $0x164] sm:$0xf]
    %v194 = vld [vmem:[#allocation5 + $0x168] sm:$0xf]
    %v195 = vld [vmem:[#allocation5 + $0x16c] sm:$0xf]
    %v196 = vld [vmem:[#allocation5 + $0x170] sm:$0xf]
    %v197 = vld [vmem:[#allocation5 + $0x174] sm:$0xf]
    %v198 = vld [vmem:[#allocation5 + $0x178] sm:$0xf]
    %v199 = vld [vmem:[#allocation5 + $0x17c] sm:$0xf]
    %v200 = vld [vmem:[#allocation5 + $0x180] sm:$0xf]
    %v201 = vld [vmem:[#allocation5 + $0x184] sm:$0xf]
    %v202 = vld [vmem:[#allocation5 + $0x188] sm:$0xf]
    %v203 = vld [vmem:[#allocation5 + $0x18c] sm:$0xf]
    %v204 = vld [vmem:[#allocation5 + $0x190] sm:$0xf]
    %v205 = vld [vmem:[#allocation5 + $0x194] sm:$0xf]
    %v206 = vld [vmem:[#allocation5 + $0x198] sm:$0xf]
    %v207 = vld [vmem:[#allocation5 + $0x19c] sm:$0xf]
    %v208 = vld [vmem:[#allocation5 + $0x1a0] sm:$0xf]
    %v209 = vld [vmem:[#allocation5 + $0x1a4] sm:$0xf]
    %v210 = vld [vmem:[#allocation5 + $0x1a8] sm:$0xf]
    %v211 = vld [vmem:[#allocation5 + $0x1ac] sm:$0xf]
    %v212 = vld [vmem:[#allocation5 + $0x1b0] sm:$0xf]
    %v213 = vld [vmem:[#allocation5 + $0x1b4] sm:$0xf]
    %v214 = vld [vmem:[#allocation5 + $0x1b8] sm:$0xf]
    %v215 = vld [vmem:[#allocation5 + $0x1bc] sm:$0xf]
    %v216 = vld [vmem:[#allocation5 + $0x1c0] sm:$0xf]
    %v217 = vld [vmem:[#allocation5 + $0x1c4] sm:$0xf]
    %v218 = vld [vmem:[#allocation5 + $0x1c8] sm:$0xf]
    %v219 = vld [vmem:[#allocation5 + $0x1cc] sm:$0xf]
    %v220 = vld [vmem:[#allocation5 + $0x1d0] sm:$0xf]
    %v221 = vld [vmem:[#allocation5 + $0x1d4] sm:$0xf]
    %v222 = vld [vmem:[#allocation5 + $0x1d8] sm:$0xf]
    %v223 = vld [vmem:[#allocation5 + $0x1dc] sm:$0xf]
    %v224 = vld [vmem:[#allocation5 + $0x1e0] sm:$0xf]
    %v225 = vld [vmem:[#allocation5 + $0x1e4] sm:$0xf]
    %v226 = vld [vmem:[#allocation5 + $0x1e8] sm:$0xf]
    %v227 = vld [vmem:[#allocation5 + $0x1ec] sm:$0xf]
    %v228 = vld [vmem:[#allocation5 + $0x1f0] sm:$0xf]
    %v229 = vld [vmem:[#allocation5 + $0x1f4] sm:$0xf]
    %v230 = vld [vmem:[#allocation5 + $0x1f8] sm:$0xf]
    %v231 = vld [vmem:[#allocation5 + $0x1fc] sm:$0xf]
    %v232 = vld [vmem:[%s2] sm:$0x1]
    %v234 = vperm.slane %v232, 0
    %v364 = vunpack.c.l.b16 %v104
    %v365 = vunpack.c.l.b16 %v105
    %v366 = vunpack.c.l.b16 %v106
    %v367 = vunpack.c.l.b16 %v107
    %v368 = vunpack.c.l.b16 %v108
    %v369 = vunpack.c.l.b16 %v109
    %v370 = vunpack.c.l.b16 %v110
    %v371 = vunpack.c.l.b16 %v111
    %v372 = vunpack.c.l.b16 %v112
    %v373 = vunpack.c.l.b16 %v113
    %v374 = vunpack.c.l.b16 %v114
    %v375 = vunpack.c.l.b16 %v115
    %v376 = vunpack.c.l.b16 %v116
    %v377 = vunpack.c.l.b16 %v117
    %v378 = vunpack.c.l.b16 %v118
    %v379 = vunpack.c.l.b16 %v119
    %v380 = vunpack.c.l.b16 %v120
    %v381 = vunpack.c.l.b16 %v121
    %v382 = vunpack.c.l.b16 %v122
    %v383 = vunpack.c.l.b16 %v123
    %v384 = vunpack.c.l.b16 %v124
    %v385 = vunpack.c.l.b16 %v125
    %v386 = vunpack.c.l.b16 %v126
    %v387 = vunpack.c.l.b16 %v127
    %v388 = vunpack.c.l.b16 %v128
    %v389 = vunpack.c.l.b16 %v129
    %v390 = vunpack.c.l.b16 %v130
    %v391 = vunpack.c.l.b16 %v131
    %v392 = vunpack.c.l.b16 %v132
    %v393 = vunpack.c.l.b16 %v133
    %v394 = vunpack.c.l.b16 %v134
    %v395 = vunpack.c.l.b16 %v135
    %v396 = vunpack.c.l.b16 %v136
    %v397 = vunpack.c.l.b16 %v137
    %v398 = vunpack.c.l.b16 %v138
    %v399 = vunpack.c.l.b16 %v139
    %v400 = vunpack.c.l.b16 %v140
    %v401 = vunpack.c.l.b16 %v141
    %v402 = vunpack.c.l.b16 %v142
    %v403 = vunpack.c.l.b16 %v143
    %v404 = vunpack.c.l.b16 %v144
    %v405 = vunpack.c.l.b16 %v145
    %v406 = vunpack.c.l.b16 %v146
    %v407 = vunpack.c.l.b16 %v147
    %v408 = vunpack.c.l.b16 %v148
    %v409 = vunpack.c.l.b16 %v149
    %v410 = vunpack.c.l.b16 %v150
    %v411 = vunpack.c.l.b16 %v151
    %v412 = vunpack.c.l.b16 %v152
    %v413 = vunpack.c.l.b16 %v153
    %v414 = vunpack.c.l.b16 %v154
    %v415 = vunpack.c.l.b16 %v155
    %v416 = vunpack.c.l.b16 %v156
    %v417 = vunpack.c.l.b16 %v157
    %v418 = vunpack.c.l.b16 %v158
    %v419 = vunpack.c.l.b16 %v159
    %v420 = vunpack.c.l.b16 %v160
    %v421 = vunpack.c.l.b16 %v161
    %v422 = vunpack.c.l.b16 %v162
    %v423 = vunpack.c.l.b16 %v163
    %v424 = vunpack.c.l.b16 %v164
    %v425 = vunpack.c.l.b16 %v165
    %v426 = vunpack.c.l.b16 %v166
    %v427 = vunpack.c.l.b16 %v167
    %v428 = vunpack.c.l.b16 %v168
    %v429 = vunpack.c.l.b16 %v169
    %v430 = vunpack.c.l.b16 %v170
    %v431 = vunpack.c.l.b16 %v171
    %v432 = vunpack.c.l.b16 %v172
    %v433 = vunpack.c.l.b16 %v173
    %v434 = vunpack.c.l.b16 %v174
    %v435 = vunpack.c.l.b16 %v175
    %v436 = vunpack.c.l.b16 %v176
    %v437 = vunpack.c.l.b16 %v177
    %v438 = vunpack.c.l.b16 %v178
    %v439 = vunpack.c.l.b16 %v179
    %v440 = vunpack.c.l.b16 %v180
    %v441 = vunpack.c.l.b16 %v181
    %v442 = vunpack.c.l.b16 %v182
    %v443 = vunpack.c.l.b16 %v183
    %v444 = vunpack.c.l.b16 %v184
    %v445 = vunpack.c.l.b16 %v185
    %v446 = vunpack.c.l.b16 %v186
    %v447 = vunpack.c.l.b16 %v187
    %v448 = vunpack.c.l.b16 %v188
    %v449 = vunpack.c.l.b16 %v189
    %v450 = vunpack.c.l.b16 %v190
    %v451 = vunpack.c.l.b16 %v191
    %v452 = vunpack.c.l.b16 %v192
    %v453 = vunpack.c.l.b16 %v193
    %v454 = vunpack.c.l.b16 %v194
    %v455 = vunpack.c.l.b16 %v195
    %v456 = vunpack.c.l.b16 %v196
    %v457 = vunpack.c.l.b16 %v197
    %v458 = vunpack.c.l.b16 %v198
    %v459 = vunpack.c.l.b16 %v199
    %v460 = vunpack.c.l.b16 %v200
    %v461 = vunpack.c.l.b16 %v201
    %v462 = vunpack.c.l.b16 %v202
    %v463 = vunpack.c.l.b16 %v203
    %v464 = vunpack.c.l.b16 %v204
    %v465 = vunpack.c.l.b16 %v205
    %v466 = vunpack.c.l.b16 %v206
    %v467 = vunpack.c.l.b16 %v207
    %v468 = vunpack.c.l.b16 %v208
    %v469 = vunpack.c.l.b16 %v209
    %v470 = vunpack.c.l.b16 %v210
    %v471 = vunpack.c.l.b16 %v211
    %v472 = vunpack.c.l.b16 %v212
    %v473 = vunpack.c.l.b16 %v213
    %v474 = vunpack.c.l.b16 %v214
    %v475 = vunpack.c.l.b16 %v215
    %v476 = vunpack.c.l.b16 %v216
    %v477 = vunpack.c.l.b16 %v217
    %v478 = vunpack.c.l.b16 %v218
    %v479 = vunpack.c.l.b16 %v219
    %v480 = vunpack.c.l.b16 %v220
    %v481 = vunpack.c.l.b16 %v221
    %v482 = vunpack.c.l.b16 %v222
    %v483 = vunpack.c.l.b16 %v223
    %v484 = vunpack.c.l.b16 %v224
    %v485 = vunpack.c.l.b16 %v225
    %v486 = vunpack.c.l.b16 %v226
    %v487 = vunpack.c.l.b16 %v227
    %v488 = vunpack.c.l.b16 %v228
    %v489 = vunpack.c.l.b16 %v229
    %v490 = vunpack.c.l.b16 %v230
    %v491 = vunpack.c.l.b16 %v231
    %v492 = vpack.c.b16 %v365, %v364
    %v493 = vpack.c.b16 %v367, %v366
    %v494 = vpack.c.b16 %v369, %v368
    %v495 = vpack.c.b16 %v371, %v370
    %v496 = vpack.c.b16 %v373, %v372
    %v497 = vpack.c.b16 %v375, %v374
    %v498 = vpack.c.b16 %v377, %v376
    %v499 = vpack.c.b16 %v379, %v378
    %v500 = vpack.c.b16 %v381, %v380
    %v501 = vpack.c.b16 %v383, %v382
    %v502 = vpack.c.b16 %v385, %v384
    %v503 = vpack.c.b16 %v387, %v386
    %v504 = vpack.c.b16 %v389, %v388
    %v505 = vpack.c.b16 %v391, %v390
    %v506 = vpack.c.b16 %v393, %v392
    %v507 = vpack.c.b16 %v395, %v394
    %v508 = vpack.c.b16 %v397, %v396
    %v509 = vpack.c.b16 %v399, %v398
    %v510 = vpack.c.b16 %v401, %v400
    %v511 = vpack.c.b16 %v403, %v402
    %v512 = vpack.c.b16 %v405, %v404
    %v513 = vpack.c.b16 %v407, %v406
    %v514 = vpack.c.b16 %v409, %v408
    %v515 = vpack.c.b16 %v411, %v410
    %v516 = vpack.c.b16 %v413, %v412
    %v517 = vpack.c.b16 %v415, %v414
    %v518 = vpack.c.b16 %v417, %v416
    %v519 = vpack.c.b16 %v419, %v418
    %v520 = vpack.c.b16 %v421, %v420
    %v521 = vpack.c.b16 %v423, %v422
    %v522 = vpack.c.b16 %v425, %v424
    %v523 = vpack.c.b16 %v427, %v426
    %v524 = vpack.c.b16 %v429, %v428
    %v525 = vpack.c.b16 %v431, %v430
    %v526 = vpack.c.b16 %v433, %v432
    %v527 = vpack.c.b16 %v435, %v434
    %v528 = vpack.c.b16 %v437, %v436
    %v529 = vpack.c.b16 %v439, %v438
    %v530 = vpack.c.b16 %v441, %v440
    %v531 = vpack.c.b16 %v443, %v442
    %v532 = vpack.c.b16 %v445, %v444
    %v533 = vpack.c.b16 %v447, %v446
    %v534 = vpack.c.b16 %v449, %v448
    %v535 = vpack.c.b16 %v451, %v450
    %v536 = vpack.c.b16 %v453, %v452
    %v537 = vpack.c.b16 %v455, %v454
    %v538 = vpack.c.b16 %v457, %v456
    %v539 = vpack.c.b16 %v459, %v458
    %v540 = vpack.c.b16 %v461, %v460
    %v541 = vpack.c.b16 %v463, %v462
    %v542 = vpack.c.b16 %v465, %v464
    %v543 = vpack.c.b16 %v467, %v466
    %v544 = vpack.c.b16 %v469, %v468
    %v545 = vpack.c.b16 %v471, %v470
    %v546 = vpack.c.b16 %v473, %v472
    %v547 = vpack.c.b16 %v475, %v474
    %v548 = vpack.c.b16 %v477, %v476
    %v549 = vpack.c.b16 %v479, %v478
    %v550 = vpack.c.b16 %v481, %v480
    %v551 = vpack.c.b16 %v483, %v482
    %v552 = vpack.c.b16 %v485, %v484
    %v553 = vpack.c.b16 %v487, %v486
    %v554 = vpack.c.b16 %v489, %v488
    %v555 = vpack.c.b16 %v491, %v490
    %620 = vmatpush.bf16.msra.mxu0 %v499
    %621 = vmatpush.bf16.msra.mxu0 %v498
    %622 = vmatpush.bf16.msra.mxu0 %v497
    %623 = vmatpush.bf16.msra.mxu0 %v496
    %624 = vmatpush.bf16.msra.mxu0 %v495
    %625 = vmatpush.bf16.msra.mxu0 %v494
    %626 = vmatpush.bf16.msra.mxu0 %v493
    %627 = vmatpush.bf16.msra.mxu0 %v492
    %628 = vmatmul.bf16.gmra.mxu0 %v96
    %v629 = vpop.f32.mrf.mxu0
    %v630 = vadd.f32 %v234, %v629
    %v631 = vpop.f32.mrf.mxu0
    %632 = vdwg.mxu0
    %633 = vmatpush.bf16.msra.mxu0 %v507
    %634 = vmatpush.bf16.msra.mxu0 %v506
    %635 = vmatpush.bf16.msra.mxu0 %v505
    %636 = vmatpush.bf16.msra.mxu0 %v504
    %637 = vmatpush.bf16.msra.mxu0 %v503
    %638 = vmatpush.bf16.msra.mxu0 %v502
    %639 = vmatpush.bf16.msra.mxu0 %v501
    %640 = vmatpush.bf16.msra.mxu0 %v500
    %641 = vmatmul.bf16.gmra.mxu0 %v97
    %v642 = vpop.f32.mrf.mxu0
    %v643 = vadd.f32 %v630, %v642
    %v644 = vpop.f32.mrf.mxu0
    %645 = vdwg.mxu0
    %646 = vmatpush.bf16.msra.mxu0 %v515
    %647 = vmatpush.bf16.msra.mxu0 %v514
    %648 = vmatpush.bf16.msra.mxu0 %v513
    %649 = vmatpush.bf16.msra.mxu0 %v512
    %650 = vmatpush.bf16.msra.mxu0 %v511
    %651 = vmatpush.bf16.msra.mxu0 %v510
    %652 = vmatpush.bf16.msra.mxu0 %v509
    %653 = vmatpush.bf16.msra.mxu0 %v508
    %654 = vmatmul.bf16.gmra.mxu0 %v98
    %v655 = vpop.f32.mrf.mxu0
    %v656 = vadd.f32 %v643, %v655
    %v657 = vpop.f32.mrf.mxu0
    %658 = vdwg.mxu0
    %659 = vmatpush.bf16.msra.mxu0 %v523
    %660 = vmatpush.bf16.msra.mxu0 %v522
    %661 = vmatpush.bf16.msra.mxu0 %v521
    %662 = vmatpush.bf16.msra.mxu0 %v520
    %663 = vmatpush.bf16.msra.mxu0 %v519
    %664 = vmatpush.bf16.msra.mxu0 %v518
    %665 = vmatpush.bf16.msra.mxu0 %v517
    %666 = vmatpush.bf16.msra.mxu0 %v516
    %667 = vmatmul.bf16.gmra.mxu0 %v99
    %v668 = vpop.f32.mrf.mxu0
    %v669 = vadd.f32 %v656, %v668
    %v670 = vpop.f32.mrf.mxu0
    %671 = vdwg.mxu0
    %672 = vmatpush.bf16.msra.mxu0 %v531
    %673 = vmatpush.bf16.msra.mxu0 %v530
    %674 = vmatpush.bf16.msra.mxu0 %v529
    %675 = vmatpush.bf16.msra.mxu0 %v528
    %676 = vmatpush.bf16.msra.mxu0 %v527
    %677 = vmatpush.bf16.msra.mxu0 %v526
    %678 = vmatpush.bf16.msra.mxu0 %v525
    %679 = vmatpush.bf16.msra.mxu0 %v524
    %680 = vmatmul.bf16.gmra.mxu0 %v100
    %v681 = vpop.f32.mrf.mxu0
    %v682 = vadd.f32 %v669, %v681
    %v683 = vpop.f32.mrf.mxu0
    %684 = vdwg.mxu0
    %685 = vmatpush.bf16.msra.mxu0 %v539
    %686 = vmatpush.bf16.msra.mxu0 %v538
    %687 = vmatpush.bf16.msra.mxu0 %v537
    %688 = vmatpush.bf16.msra.mxu0 %v536
    %689 = vmatpush.bf16.msra.mxu0 %v535
    %690 = vmatpush.bf16.msra.mxu0 %v534
    %691 = vmatpush.bf16.msra.mxu0 %v533
    %692 = vmatpush.bf16.msra.mxu0 %v532
    %693 = vmatmul.bf16.gmra.mxu0 %v101
    %v694 = vpop.f32.mrf.mxu0
    %v695 = vadd.f32 %v682, %v694
    %v696 = vpop.f32.mrf.mxu0
    %697 = vdwg.mxu0
    %698 = vmatpush.bf16.msra.mxu0 %v547
    %699 = vmatpush.bf16.msra.mxu0 %v546
    %700 = vmatpush.bf16.msra.mxu0 %v545
    %701 = vmatpush.bf16.msra.mxu0 %v544
    %702 = vmatpush.bf16.msra.mxu0 %v543
    %703 = vmatpush.bf16.msra.mxu0 %v542
    %704 = vmatpush.bf16.msra.mxu0 %v541
    %705 = vmatpush.bf16.msra.mxu0 %v540
    %706 = vmatmul.bf16.gmra.mxu0 %v102
    %v707 = vpop.f32.mrf.mxu0
    %v708 = vadd.f32 %v695, %v707
    %v709 = vpop.f32.mrf.mxu0
    %710 = vdwg.mxu0
    %711 = vmatpush.bf16.msra.mxu0 %v555
    %712 = vmatpush.bf16.msra.mxu0 %v554
    %713 = vmatpush.bf16.msra.mxu0 %v553
    %714 = vmatpush.bf16.msra.mxu0 %v552
    %715 = vmatpush.bf16.msra.mxu0 %v551
    %716 = vmatpush.bf16.msra.mxu0 %v550
    %717 = vmatpush.bf16.msra.mxu0 %v549
    %718 = vmatpush.bf16.msra.mxu0 %v548
    %719 = vmatmul.bf16.gmra.mxu0 %v103
    %v720 = vpop.f32.mrf.mxu0
    %v721 = vadd.f32 %v708, %v720
    %v722 = vpop.f32.mrf.mxu0
    %723 = vdwg.mxu0
    %v724 = vmax.f32 %v721, 0.0
    %v725 = vpack.c.bf16 %v724, %v724
    %v726 = vld [vmem:[#allocation7] sm:$0xf]
    %v727 = vld [vmem:[#allocation7 + $0x4] sm:$0xf]
    %v728 = vld [vmem:[#allocation7 + $0x8] sm:$0xf]
    %v729 = vld [vmem:[#allocation7 + $0xc] sm:$0xf]
    %v730 = vld [vmem:[#allocation7 + $0x10] sm:$0xf]
    %v731 = vld [vmem:[#allocation7 + $0x14] sm:$0xf]
    %v732 = vld [vmem:[#allocation7 + $0x18] sm:$0xf]
    %v733 = vld [vmem:[#allocation7 + $0x1c] sm:$0xf]
    %v734 = vld [vmem:[#allocation7 + $0x20] sm:$0xf]
    %v735 = vld [vmem:[#allocation7 + $0x24] sm:$0xf]
    %v736 = vld [vmem:[#allocation7 + $0x28] sm:$0xf]
    %v737 = vld [vmem:[#allocation7 + $0x2c] sm:$0xf]
    %v738 = vld [vmem:[#allocation7 + $0x30] sm:$0xf]
    %v739 = vld [vmem:[#allocation7 + $0x34] sm:$0xf]
    %v740 = vld [vmem:[#allocation7 + $0x38] sm:$0xf]
    %v741 = vld [vmem:[#allocation7 + $0x3c] sm:$0xf]
    %v742 = vld [vmem:[%s4] sm:$0x1]
    %v744 = vperm.slane %v742, 0
    %v762 = vunpack.c.l.b16 %v726
    %v763 = vunpack.c.l.b16 %v727
    %v764 = vunpack.c.l.b16 %v728
    %v765 = vunpack.c.l.b16 %v729
    %v766 = vunpack.c.l.b16 %v730
    %v767 = vunpack.c.l.b16 %v731
    %v768 = vunpack.c.l.b16 %v732
    %v769 = vunpack.c.l.b16 %v733
    %v770 = vunpack.c.l.b16 %v734
    %v771 = vunpack.c.l.b16 %v735
    %v772 = vunpack.c.l.b16 %v736
    %v773 = vunpack.c.l.b16 %v737
    %v774 = vunpack.c.l.b16 %v738
    %v775 = vunpack.c.l.b16 %v739
    %v776 = vunpack.c.l.b16 %v740
    %v777 = vunpack.c.l.b16 %v741
    %v778 = vpack.c.b16 %v763, %v762
    %v779 = vpack.c.b16 %v765, %v764
    %v780 = vpack.c.b16 %v767, %v766
    %v781 = vpack.c.b16 %v769, %v768
    %v782 = vpack.c.b16 %v771, %v770
    %v783 = vpack.c.b16 %v773, %v772
    %v784 = vpack.c.b16 %v775, %v774
    %v785 = vpack.c.b16 %v777, %v776
    %794 = vmatpush.bf16.msra.mxu0 %v785
    %795 = vmatpush.bf16.msra.mxu0 %v784
    %796 = vmatpush.bf16.msra.mxu0 %v783
    %797 = vmatpush.bf16.msra.mxu0 %v782
    %798 = vmatpush.bf16.msra.mxu0 %v781
    %799 = vmatpush.bf16.msra.mxu0 %v780
    %800 = vmatpush.bf16.msra.mxu0 %v779
    %801 = vmatpush.bf16.msra.mxu0 %v778
    %802 = vmatmul.bf16.gmra.mxu0 %v725
    %v803 = vpop.f32.mrf.mxu0
    %v804 = vadd.f32 %v744, %v803
    %v805 = vpop.f32.mrf.mxu0
    %806 = vdwg.mxu0
    %v807 = vmax.f32 %v804, 0.0
    %v808 = vpack.c.bf16 %v807, %v807
    %v809 = vld [vmem:[#allocation8] sm:$0xf]
    %v810 = vld [vmem:[#allocation8 + $0x4] sm:$0xf]
    %v811 = vld [vmem:[#allocation8 + $0x8] sm:$0xf]
    %v812 = vld [vmem:[#allocation8 + $0xc] sm:$0xf]
    %v813 = vld [vmem:[#allocation8 + $0x10] sm:$0xf]
    %v814 = vld [vmem:[#allocation8 + $0x14] sm:$0xf]
    %v815 = vld [vmem:[#allocation8 + $0x18] sm:$0xf]
    %v816 = vld [vmem:[#allocation8 + $0x1c] sm:$0xf]
    %v817 = vld [vmem:[#allocation8 + $0x20] sm:$0xf]
    %v818 = vld [vmem:[#allocation8 + $0x24] sm:$0xf]
    %v819 = vld [vmem:[#allocation8 + $0x28] sm:$0xf]
    %v820 = vld [vmem:[#allocation8 + $0x2c] sm:$0xf]
    %v821 = vld [vmem:[#allocation8 + $0x30] sm:$0xf]
    %v822 = vld [vmem:[#allocation8 + $0x34] sm:$0xf]
    %v823 = vld [vmem:[#allocation8 + $0x38] sm:$0xf]
    %v824 = vld [vmem:[#allocation8 + $0x3c] sm:$0xf]
    %v825 = vld [vmem:[%s6] sm:$0x1]
    %v827 = vperm.slane %v825, 0
    %v845 = vunpack.c.l.b16 %v809
    %v846 = vunpack.c.l.b16 %v810
    %v847 = vunpack.c.l.b16 %v811
    %v848 = vunpack.c.l.b16 %v812
    %v849 = vunpack.c.l.b16 %v813
    %v850 = vunpack.c.l.b16 %v814
    %v851 = vunpack.c.l.b16 %v815
    %v852 = vunpack.c.l.b16 %v816
    %v853 = vunpack.c.l.b16 %v817
    %v854 = vunpack.c.l.b16 %v818
    %v855 = vunpack.c.l.b16 %v819
    %v856 = vunpack.c.l.b16 %v820
    %v857 = vunpack.c.l.b16 %v821
    %v858 = vunpack.c.l.b16 %v822
    %v859 = vunpack.c.l.b16 %v823
    %v860 = vunpack.c.l.b16 %v824
    %v861 = vpack.c.b16 %v846, %v845
    %v862 = vpack.c.b16 %v848, %v847
    %v863 = vpack.c.b16 %v850, %v849
    %v864 = vpack.c.b16 %v852, %v851
    %v865 = vpack.c.b16 %v854, %v853
    %v866 = vpack.c.b16 %v856, %v855
    %v867 = vpack.c.b16 %v858, %v857
    %v868 = vpack.c.b16 %v860, %v859
    %877 = vmatpush.bf16.msra.mxu0 %v868
    %878 = vmatpush.bf16.msra.mxu0 %v867
    %879 = vmatpush.bf16.msra.mxu0 %v866
    %880 = vmatpush.bf16.msra.mxu0 %v865
    %881 = vmatpush.bf16.msra.mxu0 %v864
    %882 = vmatpush.bf16.msra.mxu0 %v863
    %883 = vmatpush.bf16.msra.mxu0 %v862
    %884 = vmatpush.bf16.msra.mxu0 %v861
    %885 = vmatmul.bf16.gmra.mxu0 %v808
    %v886 = vpop.f32.mrf.mxu0
    %v887 = vadd.f32 %v827, %v886
    %v888 = vpop.f32.mrf.mxu0
    %889 = vdwg.mxu0
    %890 = vmax.xlane.f32.xlu0 %v887
    %v891 = vpop.xlane.xlu0 %890
    %v892 = vsub.f32 %v887, %v891
    %v893 = vmul.f32 %v892, 1.442695
    %v894 = vpow.pop %v893
    %895 = vadd.xlane.f32.xlu0 %v894
    %v896 = vpop.xlane.xlu0 %895
    %v897 = vrcp.pop %v896
    %v898 = vmul.f32 %v894, %v897
    %v899 = vpack.c.bf16 %v898, %v898
    %900 = vst [vmem:[#allocation10] sm:$0xf] %v899
    // Predicated region
    $region46: #{tpu_custom_call.1} parent=1 // pred_check
      _
    $region47: #{tpu_custom_call.1} parent=1 // pred_check_branch
      %902 = sbr.rel (0) target = $region49
    $region48: #{tpu_custom_call.1} parent=1 // pred_region
      %904 = vsyncadd [#allocation4], 0
      %s906 = sshll.u32 [#allocation10], 4
      %s907 = int_to_ptr.vmem [resolvable:$true] %s906
      %s908 = sshll.u32 %s7, 4
      %s909 = int_to_ptr.hbm [resolvable:$true] %s908
      %911 = dma.vmem_to_hbm [thread:$0]  %s907, 64, %s909, [#allocation4]
    $region49: #{tpu_custom_call.1} parent=1 // pred_fallthru
      _
    // Predicated region
    $region50: #{tpu_custom_call.1} parent=1 // pred_check
      _
    $region51: #{tpu_custom_call.1} parent=1 // pred_check_branch
      %913 = sbr.rel (0) target = $region53
    $region52: #{tpu_custom_call.1} parent=1 // pred_region
      %915 = dma.done [#allocation4], 64
    $region53: #{tpu_custom_call.1} parent=1 // pred_fallthru
      _
    %916 = vsyncpa [#allocation3], 1
    %917 = vsyncpa [#allocation6], 1
    %918 = vsyncpa [#allocation9], 1
    %919 = vsyncpa [#allocation4], 1

</llo_original>
